<compile_context>
chip_gen: v7x
topology: tpu7x:2x2x1
jax: 0.10.0
libtpu: 0.0.40
codegen_flags: <defaults>
</compile_context>

<pallas_src>
from functools import partial

import jax
import jax.numpy as jnp
from jax.experimental import pallas as pl
from jax.experimental.pallas import tpu as pltpu

EPS = 1e-8


def _multitask_loss_kernel(losses_ref, log_vars_ref, is_reg_ref, out_ref, *, reduction):
    # Refs are (1, n_tasks). Single load per ref; math in f32.
    losses = losses_ref[...].astype(jnp.float32)
    log_vars = log_vars_ref[...]      # already f32 (wrapper keeps param in f32)
    is_reg = is_reg_ref[...]          # already f32

    # stds**2 == exp(log_vars); log(stds) == 0.5 * log_vars
    denom = (is_reg + 1.0) * (jnp.exp(log_vars) + EPS)
    per_task = losses / denom + 0.5 * log_vars

    if reduction == "sum":
        out_ref[0, 0] = jnp.sum(per_task)
    elif reduction == "mean":
        out_ref[0, 0] = jnp.sum(per_task) * (1.0 / per_task.shape[-1])
    else:  # 'none'
        out_ref[...] = per_task.astype(out_ref.dtype)


def _multi_task_loss_impl(losses, log_vars, is_regression, reduction):
    dtype = losses.dtype
    n_tasks = losses.shape[0]

    # Reshape only (metadata); keep log_vars / is_regression in f32.
    losses2 = losses.reshape(1, n_tasks)
    log_vars2 = log_vars.astype(jnp.float32).reshape(1, n_tasks)
    is_reg2 = is_regression.astype(jnp.float32).reshape(1, n_tasks)

    in_specs = [
        pl.BlockSpec((1, n_tasks), lambda: (0, 0), memory_space=pltpu.VMEM),
        pl.BlockSpec((1, n_tasks), lambda: (0, 0), memory_space=pltpu.VMEM),
        pl.BlockSpec((1, n_tasks), lambda: (0, 0), memory_space=pltpu.VMEM),
    ]

    if reduction in ("sum", "mean"):
        # Scalar result straight to SMEM; cast to the input dtype outside.
        out_shape = jax.ShapeDtypeStruct((1, 1), jnp.float32)
        out_spec = pl.BlockSpec((1, 1), lambda: (0, 0), memory_space=pltpu.SMEM)
    else:
        out_shape = jax.ShapeDtypeStruct((1, n_tasks), dtype)
        out_spec = pl.BlockSpec((1, n_tasks), lambda: (0, 0), memory_space=pltpu.VMEM)

    out = pl.pallas_call(
        partial(_multitask_loss_kernel, reduction=reduction),
        out_shape=out_shape,
        grid=(),
        in_specs=in_specs,
        out_specs=out_spec,
    )(losses2, log_vars2, is_reg2)

    if reduction in ("sum", "mean"):
        return out[0, 0].astype(dtype)
    return out.reshape(n_tasks)


# ----------------------------------------------------------------------------
# Differentiable wrapper (MultiTaskLoss exists to train log_vars).
# Backward is a handful of elementwise ops; pure jnp is fine there.
# is_regression is treated as a non-trainable float buffer (zero cotangent).
# ----------------------------------------------------------------------------
@partial(jax.custom_vjp, nondiff_argnums=(3,))
def _mtl_vjp(losses, log_vars, is_regression, reduction):
    return _multi_task_loss_impl(losses, log_vars, is_regression, reduction)


def _mtl_fwd(losses, log_vars, is_regression, reduction):
    out = _multi_task_loss_impl(losses, log_vars, is_regression, reduction)
    return out, (losses, log_vars, is_regression)


def _mtl_bwd(reduction, residuals, g):
    losses, log_vars, is_regression = residuals
    l = losses.astype(jnp.float32)
    lv = log_vars.astype(jnp.float32)
    r = is_regression.astype(jnp.float32)

    e = jnp.exp(lv)
    coeffs = 1.0 / ((r + 1.0) * (e + EPS))

    if reduction == "sum":
        g_vec = jnp.broadcast_to(g.astype(jnp.float32), l.shape)
    elif reduction == "mean":
        g_vec = jnp.broadcast_to(g.astype(jnp.float32) / l.shape[0], l.shape)
    else:
        g_vec = g.astype(jnp.float32)

    d_losses = (g_vec * coeffs).astype(losses.dtype)
    d_log_vars = (g_vec * (0.5 - l * coeffs * coeffs * (r + 1.0) * e)).astype(log_vars.dtype)
    d_is_reg = jnp.zeros_like(is_regression)
    return d_losses, d_log_vars, d_is_reg


_mtl_vjp.defvjp(_mtl_fwd, _mtl_bwd)


def multi_task_loss(losses, log_vars, is_regression, reduction="none"):
    """Pallas implementation of MultiTaskLoss.forward.

    losses:         (n_tasks,) float array (per-task losses)
    log_vars:       (n_tasks,) float array (learnable parameter, init zeros)
    is_regression:  (n_tasks,) float array (task-type buffer)
    """
    return _mtl_vjp(losses, log_vars, is_regression, reduction)


def _reference(losses, log_vars, is_regression):
    """Direct transcription of the torch forward (for correctness checks)."""
    dtype = losses.dtype
    stds = jnp.exp(log_vars.astype(dtype)) ** 0.5
    coeffs = 1.0 / ((is_regression.astype(dtype) + 1.0) * (stds**2 + EPS))
    return coeffs * losses + jnp.log(stds)


if __name__ == "__main__":
    n_tasks = 4

    key = jax.random.PRNGKey(0)
    k_loss, k_lv = jax.random.split(key)

    # deterministic example per-task losses
    losses = jax.random.uniform(k_loss, (n_tasks,), dtype=jnp.float32) * 2.0
    # is_regression buffer (fixed, deterministic)
    is_regression = jnp.array([1.0, 0.0, 1.0, 0.0], dtype=jnp.float32)

    # parameter init matching nn.Parameter(torch.zeros(n_tasks)), plus a
    # nonzero variant to exercise the exp / 0.5*log_vars path.
    log_vars_cases = [
        jnp.zeros((n_tasks,), dtype=jnp.float32),
        jax.random.normal(k_lv, (n_tasks,), dtype=jnp.float32) * 0.5,
    ]

    TOL = dict(atol=1e-5, rtol=1e-5)  # exact divide now; tight tolerance

    for log_vars in log_vars_cases:
        ref = _reference(losses, log_vars, is_regression)

        out = jax.block_until_ready(
            multi_task_loss(losses, log_vars, is_regression, reduction="none")
        )
        assert out.shape == (n_tasks,)
        assert jnp.allclose(out, ref, **TOL), (out, ref)

        out_sum = jax.block_until_ready(
            multi_task_loss(losses, log_vars, is_regression, reduction="sum")
        )
        assert jnp.allclose(out_sum, jnp.sum(ref), **TOL), (out_sum, jnp.sum(ref))

        out_mean = jax.block_until_ready(
            multi_task_loss(losses, log_vars, is_regression, reduction="mean")
        )
        assert jnp.allclose(out_mean, jnp.mean(ref), **TOL), (out_mean, jnp.mean(ref))

    # Gradient check (training log_vars is the point of this module).
    log_vars = log_vars_cases[1]
    g_ker = jax.grad(
        lambda l, lv: multi_task_loss(l, lv, is_regression, "sum"), argnums=(0, 1)
    )(losses, log_vars)
    g_ref = jax.grad(
        lambda l, lv: jnp.sum(_reference(l, lv, is_regression)), argnums=(0, 1)
    )(losses, log_vars)
    for a, b in zip(g_ker, g_ref):
        a = jax.block_until_ready(a)
        assert jnp.allclose(a, b, atol=1e-4, rtol=1e-4), (a, b)

    print("KERNEL_OK")
</pallas_src>

<mosaic_0001>
module attributes {stable_mosaic.version = 11 : i64} {
  func.func @_multitask_loss_kernel(%arg0: memref<1x4xf32, #tpu.memory_space<vmem>>, %arg1: memref<1x4xf32, #tpu.memory_space<vmem>>, %arg2: memref<1x4xf32, #tpu.memory_space<vmem>>, %arg3: memref<1x4xf32, #tpu.memory_space<vmem>>) attributes {dimension_semantics = [], scalar_prefetch = 0 : i64, scratch_operands = 0 : i64, tpu.core_type = #tpu.core_type<tc>} {
    %c0 = arith.constant 0 : index
    %c0_0 = arith.constant 0 : index
    %0 = vector.load %arg0[%c0, %c0_0] : memref<1x4xf32, #tpu.memory_space<vmem>>, vector<1x4xf32>
    %c0_1 = arith.constant 0 : index
    %c0_2 = arith.constant 0 : index
    %1 = vector.load %arg1[%c0_1, %c0_2] : memref<1x4xf32, #tpu.memory_space<vmem>>, vector<1x4xf32>
    %c0_3 = arith.constant 0 : index
    %c0_4 = arith.constant 0 : index
    %2 = vector.load %arg2[%c0_3, %c0_4] : memref<1x4xf32, #tpu.memory_space<vmem>>, vector<1x4xf32>
    %cst = arith.constant 1.000000e+00 : f32
    %3 = vector.broadcast %cst : f32 to vector<1x4xf32>
    %4 = arith.addf %2, %3 : vector<1x4xf32>
    %5 = math.exp %1 : vector<1x4xf32>
    %cst_5 = arith.constant 9.99999993E-9 : f32
    %6 = vector.broadcast %cst_5 : f32 to vector<1x4xf32>
    %7 = arith.addf %5, %6 : vector<1x4xf32>
    %8 = arith.mulf %4, %7 : vector<1x4xf32>
    %9 = arith.divf %0, %8 : vector<1x4xf32>
    %cst_6 = arith.constant 5.000000e-01 : f32
    %10 = vector.broadcast %cst_6 : f32 to vector<1x4xf32>
    %11 = arith.mulf %10, %1 : vector<1x4xf32>
    %12 = arith.addf %9, %11 : vector<1x4xf32>
    %c0_7 = arith.constant 0 : index
    %c0_8 = arith.constant 0 : index
    %13 = vector.load %arg3[%c0_7, %c0_8] : memref<1x4xf32, #tpu.memory_space<vmem>>, vector<1x4xf32>
    tpu.vector_store %arg3[%c0_7, %c0_8], %12 {strides = array<i32>} : memref<1x4xf32, #tpu.memory_space<vmem>>, vector<1x4xf32>,
    return
  }
}

</mosaic_0001>

<llo_original>
// kernel: tpu_custom_call.1
$region0: #{tpu_custom_call.1}
  #allocation0 [shape = 'u32[]', space=smem, size = 0x4, offset = 0x4, fixed_abs, tag = 'smem constant byte address 0x4 - core index']
  #allocation1 [shape = 'u32[144,128]{1,0:T(1,128)}', space=vmem, size = 0x12000, scoped, tag = 'internal scratch']
  %s0 = inlined_call_operand.hbm [shape: f32[1,4], index: 0, kind: input, shape index: {}]
  %s1 = inlined_call_operand.vmem [shape: f32[1,4], index: 1, kind: input, shape index: {}]
  %s2 = inlined_call_operand.vmem [shape: f32[1,4], index: 2, kind: input, shape index: {}]
  %s3 = inlined_call_operand.hbm [shape: f32[1,4], index: 3, kind: output, shape index: {}]
  %s4 = sld [smem:[#allocation0]]
  $region26: #{tpu_custom_call.1} parent=0
    _
  %s6 = ssub.s32 1, %s4
  %s7 = scalar_select 0, %s6, %s4
  $region1: #{tpu_custom_call.1} parent=0
    #allocation2 [shape = 'u8[512]{0}', space=vmem, size = 0x400, scoped, tag = 'input window, operand 0, single buffered']
    #allocation3 [shape = 's32[1]{0}', space=sflag, size = 0x4, scoped, tag = 'scoped memory for tpu_custom_call.1']
    #allocation4 [shape = 's32[1]{0}', space=sflag, size = 0x4, scoped, tag = 'scoped memory for tpu_custom_call.1']
    #allocation5 [shape = 'u8[512]{0}', space=vmem, size = 0x400, scoped, tag = 'output window, operand 0, single buffered']
    %8 = vsyncpa [#allocation3], 0
    %9 = vsyncpa [#allocation4], 0
    // Predicated region
    $region2: #{tpu_custom_call.1} parent=1 // pred_check
      _
    $region3: #{tpu_custom_call.1} parent=1 // pred_check_branch
      %11 = sbr.rel (0) target = $region5
    $region4: #{tpu_custom_call.1} parent=1 // pred_region
      %s13 = ssub.s32 16, 16
      %14 = vsyncadd [#allocation3], %s13
      %s16 = sshll.u32 [#allocation2], 4
      %s17 = int_to_ptr.vmem [resolvable:$true] %s16
      %19 = dma.hbm_to_vmem [thread:$0]  %s0, 16, %s17, [#allocation3]
    $region5: #{tpu_custom_call.1} parent=1 // pred_fallthru
      _
    // Predicated region
    $region6: #{tpu_custom_call.1} parent=1 // pred_check
      _
    $region7: #{tpu_custom_call.1} parent=1 // pred_check_branch
      %21 = sbr.rel (0) target = $region9
    $region8: #{tpu_custom_call.1} parent=1 // pred_region
      _
    $region9: #{tpu_custom_call.1} parent=1 // pred_fallthru
      _
    // Predicated region
    $region10: #{tpu_custom_call.1} parent=1 // pred_check
      _
    $region11: #{tpu_custom_call.1} parent=1 // pred_check_branch
      %23 = sbr.rel (0) target = $region13
    $region12: #{tpu_custom_call.1} parent=1 // pred_region
      _
    $region13: #{tpu_custom_call.1} parent=1 // pred_fallthru
      _
    // Predicated region
    $region14: #{tpu_custom_call.1} parent=1 // pred_check
      _
    $region15: #{tpu_custom_call.1} parent=1 // pred_check_branch
      %25 = sbr.rel (0) target = $region17
    $region16: #{tpu_custom_call.1} parent=1 // pred_region
      %26 = dma.done [#allocation3], 16
    $region17: #{tpu_custom_call.1} parent=1 // pred_fallthru
      _
    %v27 = vld [vmem:[#allocation2] sm:$0x1]
    %v28 = vld [vmem:[%s1] sm:$0x1]
    %v29 = vld [vmem:[%s2] sm:$0x1]
    %v30 = vadd.f32 %v29, 1.0
    %v31 = vmul.f32 %v28, 1.442695
    %v32 = vpow.pop %v31
    %v33 = vadd.f32 %v32, 1e-08
    %v34 = vmul.f32 %v30, %v33
    %v35 = vrcp.pop %v34
    %v36 = vmul.f32 %v27, %v35
    %v37 = vmul.f32 %v28, 0.5
    %v38 = vadd.f32 %v36, %v37
    %vm39 = vcmask 24576
    %40 = vst.msk [vmem:[#allocation5] sm:$0x1] %vm39, %v38
    // Predicated region
    $region18: #{tpu_custom_call.1} parent=1 // pred_check
      _
    $region19: #{tpu_custom_call.1} parent=1 // pred_check_branch
      %42 = sbr.rel (0) target = $region21
    $region20: #{tpu_custom_call.1} parent=1 // pred_region
      %s44 = ssub.s32 16, 16
      %45 = vsyncadd [#allocation4], %s44
      %s47 = sshll.u32 [#allocation5], 4
      %s48 = int_to_ptr.vmem [resolvable:$true] %s47
      %50 = dma.vmem_to_hbm [thread:$0]  %s48, 16, %s3, [#allocation4]
    $region21: #{tpu_custom_call.1} parent=1 // pred_fallthru
      _
    // Predicated region
    $region22: #{tpu_custom_call.1} parent=1 // pred_check
      _
    $region23: #{tpu_custom_call.1} parent=1 // pred_check_branch
      %52 = sbr.rel (0) target = $region25
    $region24: #{tpu_custom_call.1} parent=1 // pred_region
      %53 = dma.done [#allocation4], 16
    $region25: #{tpu_custom_call.1} parent=1 // pred_fallthru
      _
    %54 = vsyncpa [#allocation3], 1
    %55 = vsyncpa [#allocation4], 1

</llo_original>
